<compile_context>
chip_gen: v5e
topology: v5e:2x2
jax: 0.10.0
libtpu: 0.0.40
codegen_flags: <defaults>
</compile_context>

<pallas_src>
import functools

import jax
import jax.numpy as jnp
from jax import lax
from jax.experimental import pallas as pl
from jax.experimental.pallas import tpu as pltpu

NEG_INF = float("-inf")


def _round_up(a, b):
    return (a + b - 1) // b * b


def _sparse_conv_kernel(x_ref, border_ref, w_ref, b_ref, y_ref, mo_ref,
                        *, k, Wp, Lpad, C_in, C_out, activation):
    """One batch element per grid step; all in-kernel arrays are (rows, flat-lanes)."""
    xa = x_ref[0]                                   # (C1p, Lf): [x channels, mask, 0...]
    C1p = xa.shape[0]
    m = xa[C_in:C_in + 1, :]                        # (1, Lf) zero-padded mask row

    # Apply the mask to the x channels only; mask row and zero rows pass through.
    row = lax.broadcasted_iota(jnp.int32, (C1p, 1), 0)
    xaug = jnp.where(row < C_in, xa * m, xa)        # (C1p, Lf)

    # im2col, channel-major / flat-spatial: tap (kh, kw) is a static lane shift by
    # kh*Wp + kw.  Output lane j maps to pixel (j // Wp, j % Wp); lanes with
    # (j % Wp) >= W (and j >= H*Wp) are harmless garbage dropped by the wrapper.
    taps = [xaug[:, kh * Wp + kw: kh * Wp + kw + Lpad]
            for kh in range(k) for kw in range(k)]  # k*k x (C1p, Lpad)
    col = jnp.concatenate(taps, axis=0)             # (k*k*C1p, Lpad)

    # Single MXU matmul; lane-dense (C_out+1, Lpad) result.
    r = jnp.dot(w_ref[...], col, preferred_element_type=jnp.float32)

    conv = r[:C_out, :]                             # (C_out, Lpad)
    cnt = r[C_out:C_out + 1, :]                     # (1, Lpad) = sparsity(mask)
    out = conv * (1.0 / (cnt + 1e-8)) + b_ref[...]  # bias (C_out,1) broadcasts

    if activation == "relu":
        out = jnp.maximum(out, 0.0)
    elif activation == "sigmoid":
        out = jax.nn.sigmoid(out)
    elif activation == "elu":
        out = jnp.where(out > 0, out, jnp.expm1(jnp.minimum(out, 0.0)))

    y_ref[0] = out.astype(y_ref.dtype)

    # Mask max-pool with exact MaxPool2d semantics (-inf padding): same shifted
    # lane slices on the -inf-bordered mask.  border_ref is 0 on real pixels and
    # -inf on padding, so m + border reproduces the -inf-padded mask.
    m_neg = m + border_ref[...]                     # (1, Lf)
    mmax = m_neg[:, 0:Lpad]
    for kh in range(k):
        for kw in range(k):
            if kh == 0 and kw == 0:
                continue
            d = kh * Wp + kw
            mmax = jnp.maximum(mmax, m_neg[:, d:d + Lpad])
    mo_ref[0] = mmax.astype(mo_ref.dtype)


def sparse_conv(x, mask, weight, bias, *, kernel_size, activation="relu"):
    """NCHW interface, mirroring the PyTorch module.

    x: (N, C_in, H, W) f32, mask: (N, 1, H, W) f32,
    weight: (C_out, C_in, k, k) OIHW f32, bias: (C_out,) f32.
    Returns (y (N, C_out, H, W), mask_out (N, 1, H, W)).
    """
    N, C_in, H, W = x.shape
    C_out = weight.shape[0]
    k = kernel_size
    p = k // 2
    Wp = W + 2 * p
    Limg = (H + 2 * p) * Wp                      # flattened zero-padded image length
    Lpad = _round_up(H * Wp, 128)                # lane-dense output length
    Lf = _round_up(Lpad + (k - 1) * (Wp + 1), 128)   # flattened input length
    C1p = _round_up(C_in + 1, 8)                 # channels + mask, padded to sublane tile
    KK = k * k * C1p

    f32 = jnp.float32

    # ---- plain-JAX glue: pad + flatten spatial, build augmented input/weights ----
    x_pad = jnp.pad(x.astype(f32), ((0, 0), (0, 0), (p, p), (p, p))).reshape(N, C_in, Limg)
    x_pad = jnp.pad(x_pad, ((0, 0), (0, 0), (0, Lf - Limg)))
    m_pad = jnp.pad(mask.astype(f32), ((0, 0), (0, 0), (p, p), (p, p))).reshape(N, 1, Limg)
    m_pad = jnp.pad(m_pad, ((0, 0), (0, 0), (0, Lf - Limg)))
    x_aug = jnp.concatenate(
        [x_pad, m_pad, jnp.zeros((N, C1p - C_in - 1, Lf), f32)], axis=1)   # (N, C1p, Lf)

    # Batch-invariant additive border (0 inside, -inf on padding) for the max-pool.
    border = jnp.pad(jnp.zeros((H, W), f32), ((p, p), (p, p)),
                     constant_values=NEG_INF).reshape(1, Limg)
    border = jnp.pad(border, ((0, 0), (0, Lf - Limg)), constant_values=NEG_INF)

    # Augmented, transposed im2col weights: rows o < C_out hold the conv taps
    # (zero coefficient on the mask/zero channels); row C_out is the all-ones
    # "sparsity" kernel acting only on the mask channel.
    w_hwio = jnp.transpose(weight.astype(f32), (2, 3, 1, 0)).reshape(k * k, C_in, C_out)
    w_aug = jnp.zeros((k * k, C1p, C_out + 1), f32)
    w_aug = w_aug.at[:, :C_in, :C_out].set(w_hwio)
    w_aug = w_aug.at[:, C_in, C_out].set(1.0)
    w_aug_t = w_aug.reshape(KK, C_out + 1).T            # (C_out+1, KK)
    b2 = bias.reshape(C_out, 1).astype(f32)

    kernel = functools.partial(_sparse_conv_kernel, k=k, Wp=Wp, Lpad=Lpad,
                               C_in=C_in, C_out=C_out, activation=activation)

    y_flat, mo_flat = pl.pallas_call(
        kernel,
        out_shape=(jax.ShapeDtypeStruct((N, C_out, Lpad), x.dtype),
                   jax.ShapeDtypeStruct((N, 1, Lpad), mask.dtype)),
        grid_spec=pltpu.PrefetchScalarGridSpec(
            num_scalar_prefetch=0,
            grid=(N,),
            in_specs=[
                pl.BlockSpec((1, C1p, Lf), lambda n: (n, 0, 0)),
                pl.BlockSpec((1, Lf), lambda n: (0, 0)),
                pl.BlockSpec((C_out + 1, KK), lambda n: (0, 0)),
                pl.BlockSpec((C_out, 1), lambda n: (0, 0)),
            ],
            out_specs=[
                pl.BlockSpec((1, C_out, Lpad), lambda n: (n, 0, 0)),
                pl.BlockSpec((1, 1, Lpad), lambda n: (n, 0, 0)),
            ],
        ),
        compiler_params=pltpu.CompilerParams(
            dimension_semantics=("parallel",),   # batch steps shard across megacore TCs
            vmem_limit_bytes=32 * 1024 * 1024,
        ),
    )(x_aug, border, w_aug_t, b2)

    # Un-flatten: keep only H*Wp lanes, then the W valid lanes of each Wp-wide row.
    y = y_flat[:, :, :H * Wp].reshape(N, C_out, H, Wp)[:, :, :, :W]
    m_out = mo_flat[:, :, :H * Wp].reshape(N, 1, H, Wp)[:, :, :, :W]
    return y, m_out


def reference(x, mask, weight, bias, *, kernel_size, activation="relu"):
    """Pure-JAX NCHW reference mirroring the PyTorch forward."""
    k = kernel_size
    p = k // 2
    xm = x * mask
    conv = lax.conv_general_dilated(
        xm, weight, window_strides=(1, 1), padding=[(p, p), (p, p)],
        dimension_numbers=("NCHW", "OIHW", "NCHW"))
    ones = jnp.ones((1, 1, k, k), jnp.float32)
    cnt = lax.conv_general_dilated(
        mask, ones, window_strides=(1, 1), padding=[(p, p), (p, p)],
        dimension_numbers=("NCHW", "OIHW", "NCHW"))
    out = conv * (1.0 / (cnt + 1e-8)) + bias[None, :, None, None]
    if activation == "relu":
        out = jnp.maximum(out, 0.0)
    elif activation == "sigmoid":
        out = jax.nn.sigmoid(out)
    elif activation == "elu":
        out = jnp.where(out > 0, out, jnp.expm1(jnp.minimum(out, 0.0)))
    m_out = lax.reduce_window(mask, NEG_INF, lax.max, (1, 1, k, k),
                              (1, 1, 1, 1), [(0, 0), (0, 0), (p, p), (p, p)])
    return out, m_out


if __name__ == "__main__":
    key = jax.random.PRNGKey(0)
    kx, km, kw, kb = jax.random.split(key, 4)

    N, C_in, C_out, H, W, k = 2, 4, 8, 16, 16, 3

    x = jax.random.normal(kx, (N, C_in, H, W), jnp.float32)
    mask = (jax.random.uniform(km, (N, 1, H, W)) > 0.5).astype(jnp.float32)
    # Module init: conv weight is random, bias starts at zeros — use small random
    # values for both so every term of the forward is exercised.
    weight = jax.random.normal(kw, (C_out, C_in, k, k), jnp.float32) * 0.1
    bias = jax.random.normal(kb, (C_out,), jnp.float32) * 0.1

    y, m_out = sparse_conv(x, mask, weight, bias, kernel_size=k, activation="relu")
    y = jax.block_until_ready(y)
    m_out = jax.block_until_ready(m_out)

    y_ref, m_ref = reference(x, mask, weight, bias, kernel_size=k, activation="relu")
    assert jnp.allclose(y, y_ref, atol=1e-4, rtol=1e-4), \
        f"max abs diff {float(jnp.max(jnp.abs(y - y_ref)))}"
    assert jnp.allclose(m_out, m_ref, atol=1e-6), "mask max-pool mismatch"

    print("KERNEL_OK")
</pallas_src>

<mosaic_0001>
module attributes {stable_mosaic.version = 11 : i64} {
  func.func @_sparse_conv_kernel(%arg0: i32, %arg1: memref<1x8x512xf32, #tpu.memory_space<vmem>>, %arg2: memref<1x512xf32, #tpu.memory_space<vmem>>, %arg3: memref<9x72xf32, #tpu.memory_space<vmem>>, %arg4: memref<8x1xf32, #tpu.memory_space<vmem>>, %arg5: memref<1x8x384xf32, #tpu.memory_space<vmem>>, %arg6: memref<1x1x384xf32, #tpu.memory_space<vmem>>) attributes {dimension_semantics = [#tpu.dimension_semantics<parallel>], iteration_bounds = array<i64: 2>, scalar_prefetch = 0 : i64, scratch_operands = 0 : i64, tpu.core_type = #tpu.core_type<tc>, window_params = [{transform_indices = @transform_0, window_bounds = array<i64: 1, 8, 512>}, {pipeline_mode = #tpu.pipeline_mode<synchronous>, transform_indices = @transform_1, window_bounds = array<i64: 1, 512>}, {pipeline_mode = #tpu.pipeline_mode<synchronous>, transform_indices = @transform_2, window_bounds = array<i64: 9, 72>}, {pipeline_mode = #tpu.pipeline_mode<synchronous>, transform_indices = @transform_3, window_bounds = array<i64: 8, 1>}, {transform_indices = @transform_4, window_bounds = array<i64: 1, 8, 384>}, {transform_indices = @transform_5, window_bounds = array<i64: 1, 1, 384>}]} {
    %c0 = arith.constant 0 : index
    %c0_0 = arith.constant 0 : index
    %c0_1 = arith.constant 0 : index
    %0 = vector.load %arg1[%c0, %c0_0, %c0_1] : memref<1x8x512xf32, #tpu.memory_space<vmem>>, vector<1x8x512xf32>
    %1 = vector.shape_cast %0 : vector<1x8x512xf32> to vector<8x512xf32>
    %2 = vector.extract_strided_slice %1 {offsets = [4, 0], sizes = [1, 512], strides = [1, 1]} : vector<8x512xf32> to vector<1x512xf32>
    %3 = tpu.iota {dimensions = array<i32: 0>} : vector<8x1xi32>
    %c4_i32 = arith.constant 4 : i32
    %4 = vector.broadcast %c4_i32 : i32 to vector<8x1xi32>
    %5 = arith.cmpi slt, %3, %4 : vector<8x1xi32>
    %6 = vector.broadcast %2 : vector<1x512xf32> to vector<8x512xf32>
    %7 = arith.mulf %1, %6 : vector<8x512xf32>
    %8 = vector.shape_cast %5 : vector<8x1xi1> to vector<8x1xi1>
    %9 = vector.broadcast %8 : vector<8x1xi1> to vector<8x512xi1>
    %10 = arith.select %9, %7, %1 : vector<8x512xi1>, vector<8x512xf32>
    %11 = vector.extract_strided_slice %10 {offsets = [0, 0], sizes = [8, 384], strides = [1, 1]} : vector<8x512xf32> to vector<8x384xf32>
    %12 = vector.extract_strided_slice %10 {offsets = [0, 1], sizes = [8, 384], strides = [1, 1]} : vector<8x512xf32> to vector<8x384xf32>
    %13 = vector.extract_strided_slice %10 {offsets = [0, 2], sizes = [8, 384], strides = [1, 1]} : vector<8x512xf32> to vector<8x384xf32>
    %14 = vector.extract_strided_slice %10 {offsets = [0, 18], sizes = [8, 384], strides = [1, 1]} : vector<8x512xf32> to vector<8x384xf32>
    %15 = vector.extract_strided_slice %10 {offsets = [0, 19], sizes = [8, 384], strides = [1, 1]} : vector<8x512xf32> to vector<8x384xf32>
    %16 = vector.extract_strided_slice %10 {offsets = [0, 20], sizes = [8, 384], strides = [1, 1]} : vector<8x512xf32> to vector<8x384xf32>
    %17 = vector.extract_strided_slice %10 {offsets = [0, 36], sizes = [8, 384], strides = [1, 1]} : vector<8x512xf32> to vector<8x384xf32>
    %18 = vector.extract_strided_slice %10 {offsets = [0, 37], sizes = [8, 384], strides = [1, 1]} : vector<8x512xf32> to vector<8x384xf32>
    %19 = vector.extract_strided_slice %10 {offsets = [0, 38], sizes = [8, 384], strides = [1, 1]} : vector<8x512xf32> to vector<8x384xf32>
    %20 = tpu.concatenate %11, %12, %13, %14, %15, %16, %17, %18, %19 in 0 : vector<8x384xf32>, vector<8x384xf32>, vector<8x384xf32>, vector<8x384xf32>, vector<8x384xf32>, vector<8x384xf32>, vector<8x384xf32>, vector<8x384xf32>, vector<8x384xf32> -> vector<72x384xf32>
    %c0_2 = arith.constant 0 : index
    %c0_3 = arith.constant 0 : index
    %21 = vector.load %arg3[%c0_2, %c0_3] : memref<9x72xf32, #tpu.memory_space<vmem>>, vector<9x72xf32>
    %cst = arith.constant dense<0.000000e+00> : vector<9x384xf32>
    %22 = tpu.matmul %21, %20, %cst {dimension_numbers = #tpu.dot_dimension_numbers<[1], [0], [0], [1], [0, 0, 1, 1], [], []>} : vector<9x72xf32>, vector<72x384xf32>, vector<9x384xf32> -> vector<9x384xf32>
    %23 = vector.extract_strided_slice %22 {offsets = [0, 0], sizes = [8, 384], strides = [1, 1]} : vector<9x384xf32> to vector<8x384xf32>
    %24 = vector.extract_strided_slice %22 {offsets = [8, 0], sizes = [1, 384], strides = [1, 1]} : vector<9x384xf32> to vector<1x384xf32>
    %cst_4 = arith.constant 9.99999993E-9 : f32
    %25 = vector.broadcast %cst_4 : f32 to vector<1x384xf32>
    %26 = arith.addf %24, %25 : vector<1x384xf32>
    %cst_5 = arith.constant 1.000000e+00 : f32
    %27 = vector.broadcast %cst_5 : f32 to vector<1x384xf32>
    %28 = arith.divf %27, %26 : vector<1x384xf32>
    %29 = vector.broadcast %28 : vector<1x384xf32> to vector<8x384xf32>
    %30 = arith.mulf %23, %29 : vector<8x384xf32>
    %c0_6 = arith.constant 0 : index
    %c0_7 = arith.constant 0 : index
    %31 = vector.load %arg4[%c0_6, %c0_7] : memref<8x1xf32, #tpu.memory_space<vmem>>, vector<8x1xf32>
    %32 = vector.broadcast %31 : vector<8x1xf32> to vector<8x384xf32>
    %33 = arith.addf %30, %32 : vector<8x384xf32>
    %cst_8 = arith.constant 0.000000e+00 : f32
    %34 = vector.broadcast %cst_8 : f32 to vector<8x384xf32>
    %35 = arith.maximumf %33, %34 : vector<8x384xf32>
    %c0_9 = arith.constant 0 : index
    %c0_10 = arith.constant 0 : index
    %c0_11 = arith.constant 0 : index
    %36 = vector.load %arg5[%c0_9, %c0_10, %c0_11] : memref<1x8x384xf32, #tpu.memory_space<vmem>>, vector<1x8x384xf32>
    %37 = vector.shape_cast %36 : vector<1x8x384xf32> to vector<8x384xf32>
    %38 = vector.shape_cast %35 : vector<8x384xf32> to vector<1x8x384xf32>
    tpu.vector_store %arg5[%c0_9, %c0_10, %c0_11], %38 {strides = array<i32>} : memref<1x8x384xf32, #tpu.memory_space<vmem>>, vector<1x8x384xf32>,
    %c0_12 = arith.constant 0 : index
    %c0_13 = arith.constant 0 : index
    %39 = vector.load %arg2[%c0_12, %c0_13] : memref<1x512xf32, #tpu.memory_space<vmem>>, vector<1x512xf32>
    %40 = arith.addf %2, %39 : vector<1x512xf32>
    %41 = vector.extract_strided_slice %40 {offsets = [0, 0], sizes = [1, 384], strides = [1, 1]} : vector<1x512xf32> to vector<1x384xf32>
    %42 = vector.extract_strided_slice %40 {offsets = [0, 1], sizes = [1, 384], strides = [1, 1]} : vector<1x512xf32> to vector<1x384xf32>
    %43 = arith.maximumf %41, %42 : vector<1x384xf32>
    %44 = vector.extract_strided_slice %40 {offsets = [0, 2], sizes = [1, 384], strides = [1, 1]} : vector<1x512xf32> to vector<1x384xf32>
    %45 = arith.maximumf %43, %44 : vector<1x384xf32>
    %46 = vector.extract_strided_slice %40 {offsets = [0, 18], sizes = [1, 384], strides = [1, 1]} : vector<1x512xf32> to vector<1x384xf32>
    %47 = arith.maximumf %45, %46 : vector<1x384xf32>
    %48 = vector.extract_strided_slice %40 {offsets = [0, 19], sizes = [1, 384], strides = [1, 1]} : vector<1x512xf32> to vector<1x384xf32>
    %49 = arith.maximumf %47, %48 : vector<1x384xf32>
    %50 = vector.extract_strided_slice %40 {offsets = [0, 20], sizes = [1, 384], strides = [1, 1]} : vector<1x512xf32> to vector<1x384xf32>
    %51 = arith.maximumf %49, %50 : vector<1x384xf32>
    %52 = vector.extract_strided_slice %40 {offsets = [0, 36], sizes = [1, 384], strides = [1, 1]} : vector<1x512xf32> to vector<1x384xf32>
    %53 = arith.maximumf %51, %52 : vector<1x384xf32>
    %54 = vector.extract_strided_slice %40 {offsets = [0, 37], sizes = [1, 384], strides = [1, 1]} : vector<1x512xf32> to vector<1x384xf32>
    %55 = arith.maximumf %53, %54 : vector<1x384xf32>
    %56 = vector.extract_strided_slice %40 {offsets = [0, 38], sizes = [1, 384], strides = [1, 1]} : vector<1x512xf32> to vector<1x384xf32>
    %57 = arith.maximumf %55, %56 : vector<1x384xf32>
    %c0_14 = arith.constant 0 : index
    %c0_15 = arith.constant 0 : index
    %c0_16 = arith.constant 0 : index
    %58 = vector.load %arg6[%c0_14, %c0_15, %c0_16] : memref<1x1x384xf32, #tpu.memory_space<vmem>>, vector<1x1x384xf32>
    %59 = vector.shape_cast %58 : vector<1x1x384xf32> to vector<1x384xf32>
    %60 = vector.shape_cast %57 : vector<1x384xf32> to vector<1x1x384xf32>
    tpu.vector_store %arg6[%c0_14, %c0_15, %c0_16], %60 {strides = array<i32>} : memref<1x1x384xf32, #tpu.memory_space<vmem>>, vector<1x1x384xf32>,
    return
  }
  func.func @transform_0(%arg0: i32) -> (i32, i32, i32) {
    %c0_i32 = arith.constant 0 : i32
    %c0_i32_0 = arith.constant 0 : i32
    %c0_i32_1 = arith.constant 0 : i32
    return %arg0, %c0_i32, %c0_i32_0 : i32, i32, i32
  }
  func.func @transform_1(%arg0: i32) -> (i32, i32) {
    %c0_i32 = arith.constant 0 : i32
    %c0_i32_0 = arith.constant 0 : i32
    %c0_i32_1 = arith.constant 0 : i32
    return %c0_i32, %c0_i32_0 : i32, i32
  }
  func.func @transform_2(%arg0: i32) -> (i32, i32) {
    %c0_i32 = arith.constant 0 : i32
    %c0_i32_0 = arith.constant 0 : i32
    %c0_i32_1 = arith.constant 0 : i32
    return %c0_i32, %c0_i32_0 : i32, i32
  }
  func.func @transform_3(%arg0: i32) -> (i32, i32) {
    %c0_i32 = arith.constant 0 : i32
    %c0_i32_0 = arith.constant 0 : i32
    %c0_i32_1 = arith.constant 0 : i32
    return %c0_i32, %c0_i32_0 : i32, i32
  }
  func.func @transform_4(%arg0: i32) -> (i32, i32, i32) {
    %c0_i32 = arith.constant 0 : i32
    %c0_i32_0 = arith.constant 0 : i32
    %c0_i32_1 = arith.constant 0 : i32
    return %arg0, %c0_i32, %c0_i32_0 : i32, i32, i32
  }
  func.func @transform_5(%arg0: i32) -> (i32, i32, i32) {
    %c0_i32 = arith.constant 0 : i32
    %c0_i32_0 = arith.constant 0 : i32
    %c0_i32_1 = arith.constant 0 : i32
    return %arg0, %c0_i32, %c0_i32_0 : i32, i32, i32
  }
}

</mosaic_0001>

<llo_original>
// kernel: tpu_custom_call.1
$region0: #{tpu_custom_call.1}
  #allocation0 [shape = 'u32[]', space=smem, size = 0x4, offset = 0x4, fixed_abs, tag = 'smem constant byte address 0x4 - core index']
  #allocation1 [shape = 'u32[72,128]{1,0:T(1,128)}', space=vmem, size = 0x9000, scoped, tag = 'internal scratch']
  %s0 = inlined_call_operand.hbm [shape: f32[2,8,512], index: 0, kind: input, shape index: {}]
  %s1 = inlined_call_operand.vmem [shape: f32[1,512], index: 1, kind: input, shape index: {}]
  %s2 = inlined_call_operand.hbm [shape: f32[9,72], index: 2, kind: input, shape index: {}]
  %s3 = inlined_call_operand.vmem [shape: f32[8,1], index: 3, kind: input, shape index: {}]
  %s4 = inlined_call_operand.hbm [shape: f32[2,8,384], index: 4, kind: output, shape index: {0}]
  %s5 = inlined_call_operand.hbm [shape: f32[2,1,384], index: 5, kind: output, shape index: {1}]
  %6 = xla_tuple %s4, %s5
  %s7 = sld [smem:[#allocation0]]
  $region65: #{tpu_custom_call.1} parent=0
    _
  %s9 = ssub.s32 1, %s7
  %s10 = scalar_select 0, %s9, %s7
  $region1: #{tpu_custom_call.1} parent=0
    #allocation2 [shape = 'u8[32768]{0}', space=vmem, size = 0x8000, scoped, tag = 'input window, operand 0']
    #allocation3 [shape = 's32[2]{0}', space=sflag, size = 0x8, scoped, tag = 'scoped memory for tpu_custom_call.1']
    #allocation4 [shape = 's32[2]{0}', space=sflag, size = 0x8, scoped, tag = 'scoped memory for tpu_custom_call.1']
    #allocation5 [shape = 'u8[8192]{0}', space=vmem, size = 0x2000, scoped, tag = 'input window, operand 2, single buffered']
    #allocation6 [shape = 's32[1]{0}', space=sflag, size = 0x4, scoped, tag = 'scoped memory for tpu_custom_call.1']
    #allocation7 [shape = 'u8[24576]{0}', space=vmem, size = 0x6000, scoped, tag = 'output window, operand 0']
    #allocation8 [shape = 'u8[3072]{0}', space=vmem, size = 0xc00, scoped, tag = 'output window, operand 1']
    #allocation9 [shape = 's32[2]{0}', space=sflag, size = 0x8, scoped, tag = 'scoped memory for tpu_custom_call.1']
    %11 = vsyncpa [#allocation3], 0
    %s12 = scalar_lea.sflag [#allocation3], 1
    %13 = vsyncpa %s12, 0
    %14 = vsyncpa [#allocation6], 0
    %15 = vsyncpa [#allocation4], 0
    %s16 = scalar_lea.sflag [#allocation4], 1
    %17 = vsyncpa %s16, 0
    %18 = vsyncpa [#allocation9], 0
    %s19 = scalar_lea.sflag [#allocation9], 1
    %20 = vsyncpa %s19, 0
    loop: start=0, step=1, limit=4
    $region2: #{tpu_custom_call.1} parent=1 // loop_pre_header
      _
    $region3: #{tpu_custom_call.1} parent=1 // loop_header
      %s22 = sphi 0, %s26
      %p23 = scmp.ge.s32.totalorder %s22, 4
      %s32 = sphi 0, %s34
      %s35 = sphi 0, %s32
      %s36 = sphi 0, %s35
      %s52 = sphi 0, %s36
      %s56 = sphi 0, %s56
      %s58 = sphi 0, %s56
      %s59 = sphi 0, %s58
      %s73 = sphi 0, %s59
      %s77 = sphi 0, %s77
      %s79 = sphi 0, %s77
      %s80 = sphi 0, %s79
      %s94 = sphi 0, %s80
      %s98 = sphi 0, %s98
      %s100 = sphi 0, %s98
      %s101 = sphi 0, %s100
      %s115 = sphi 0, %s101
      %s121 = sphi 0, %s123
      %s124 = sphi 0, %s121
      %s125 = sphi 0, %s124
      %s141 = sphi 0, %s125
      %s147 = sphi 0, %s149
      %s150 = sphi 0, %s147
      %s151 = sphi 0, %s150
      %s167 = sphi 0, %s151
    $region4: #{tpu_custom_call.1} parent=1 // loop_header_branch
      %25 = sbr.rel (%p23) target = $region8
    $region5: #{tpu_custom_call.1} parent=1 // loop_body
      %s27 = ssub.s32 %s22, 1
      %s28 = ssub.s32 %s22, 2
      %s29 = sadd.s32 %s22, 1
      %s30 = ssub.s32 %s22, %s29
      %p31 = scmp.eq.s32.totalorder %s30, 0
      %s33 = sadd.s32 %s32, 1
      %s34 = scalar_select %p31, %s32, %s33
      %p37 = pneg %p31
      %p38 = scmp.eq.s32.totalorder %s22, 1
      %p39 = por %p37, %p38
      %p40 = scmp.ne.s32.totalorder %s32, %s35
      %p41 = scmp.eq.s32.totalorder %s22, 0
      %p42 = por %p40, %p41
      %p43 = scmp.ne.s32.totalorder %s32, %s35
      %p44 = scmp.eq.s32.totalorder %s27, 1
      %p45 = por %p43, %p44
      %p46 = scmp.ne.s32.totalorder %s35, %s36
      %p47 = scmp.eq.s32.totalorder %s27, 0
      %p48 = por %p46, %p47
      %p49 = scmp.ne.s32.totalorder %s35, %s36
      %p50 = scmp.eq.s32.totalorder %s28, 1
      %p51 = por %p49, %p50
      %p53 = scmp.ne.s32.totalorder %s36, %s52
      %p54 = scmp.eq.s32.totalorder %s28, 0
      %p55 = por %p53, %p54
      %s57 = sadd.s32 %s56, 1
      %p60 = scmp.eq.s32.totalorder %s22, 1
      %p61 = scmp.ne.s32.totalorder %s56, %s58
      %p62 = scmp.eq.s32.totalorder %s22, 0
      %p63 = por %p61, %p62
      %p64 = scmp.ne.s32.totalorder %s56, %s58
      %p65 = scmp.eq.s32.totalorder %s27, 1
      %p66 = por %p64, %p65
      %p67 = scmp.ne.s32.totalorder %s58, %s59
      %p68 = scmp.eq.s32.totalorder %s27, 0
      %p69 = por %p67, %p68
      %p70 = scmp.ne.s32.totalorder %s58, %s59
      %p71 = scmp.eq.s32.totalorder %s28, 1
      %p72 = por %p70, %p71
      %p74 = scmp.ne.s32.totalorder %s59, %s73
      %p75 = scmp.eq.s32.totalorder %s28, 0
      %p76 = por %p74, %p75
      %s78 = sadd.s32 %s77, 1
      %p81 = scmp.eq.s32.totalorder %s22, 1
      %p82 = scmp.ne.s32.totalorder %s77, %s79
      %p83 = scmp.eq.s32.totalorder %s22, 0
      %p84 = por %p82, %p83
      %p85 = scmp.ne.s32.totalorder %s77, %s79
      %p86 = scmp.eq.s32.totalorder %s27, 1
      %p87 = por %p85, %p86
      %p88 = scmp.ne.s32.totalorder %s79, %s80
      %p89 = scmp.eq.s32.totalorder %s27, 0
      %p90 = por %p88, %p89
      %p91 = scmp.ne.s32.totalorder %s79, %s80
      %p92 = scmp.eq.s32.totalorder %s28, 1
      %p93 = por %p91, %p92
      %p95 = scmp.ne.s32.totalorder %s80, %s94
      %p96 = scmp.eq.s32.totalorder %s28, 0
      %p97 = por %p95, %p96
      %s99 = sadd.s32 %s98, 1
      %p102 = scmp.eq.s32.totalorder %s22, 1
      %p103 = scmp.ne.s32.totalorder %s98, %s100
      %p104 = scmp.eq.s32.totalorder %s22, 0
      %p105 = por %p103, %p104
      %p106 = scmp.ne.s32.totalorder %s98, %s100
      %p107 = scmp.eq.s32.totalorder %s27, 1
      %p108 = por %p106, %p107
      %p109 = scmp.ne.s32.totalorder %s100, %s101
      %p110 = scmp.eq.s32.totalorder %s27, 0
      %p111 = por %p109, %p110
      %p112 = scmp.ne.s32.totalorder %s100, %s101
      %p113 = scmp.eq.s32.totalorder %s28, 1
      %p114 = por %p112, %p113
      %p116 = scmp.ne.s32.totalorder %s101, %s115
      %p117 = scmp.eq.s32.totalorder %s28, 0
      %p118 = por %p116, %p117
      %s119 = ssub.s32 %s22, %s29
      %p120 = scmp.eq.s32.totalorder %s119, 0
      %s122 = sadd.s32 %s121, 1
      %s123 = scalar_select %p120, %s121, %s122
      %p126 = pneg %p120
      %p127 = scmp.eq.s32.totalorder %s22, 1
      %p128 = por %p126, %p127
      %p129 = scmp.ne.s32.totalorder %s121, %s124
      %p130 = scmp.eq.s32.totalorder %s22, 0
      %p131 = por %p129, %p130
      %p132 = scmp.ne.s32.totalorder %s121, %s124
      %p133 = scmp.eq.s32.totalorder %s27, 1
      %p134 = por %p132, %p133
      %p135 = scmp.ne.s32.totalorder %s124, %s125
      %p136 = scmp.eq.s32.totalorder %s27, 0
      %p137 = por %p135, %p136
      %p138 = scmp.ne.s32.totalorder %s124, %s125
      %p139 = scmp.eq.s32.totalorder %s28, 1
      %p140 = por %p138, %p139
      %p142 = scmp.ne.s32.totalorder %s125, %s141
      %p143 = scmp.eq.s32.totalorder %s28, 0
      %p144 = por %p142, %p143
      %s145 = ssub.s32 %s22, %s29
      %p146 = scmp.eq.s32.totalorder %s145, 0
      %s148 = sadd.s32 %s147, 1
      %s149 = scalar_select %p146, %s147, %s148
      %p152 = pneg %p146
      %p153 = scmp.eq.s32.totalorder %s22, 1
      %p154 = por %p152, %p153
      %p155 = scmp.ne.s32.totalorder %s147, %s150
      %p156 = scmp.eq.s32.totalorder %s22, 0
      %p157 = por %p155, %p156
      %p158 = scmp.ne.s32.totalorder %s147, %s150
      %p159 = scmp.eq.s32.totalorder %s27, 1
      %p160 = por %p158, %p159
      %p161 = scmp.ne.s32.totalorder %s150, %s151
      %p162 = scmp.eq.s32.totalorder %s27, 0
      %p163 = por %p161, %p162
      %p164 = scmp.ne.s32.totalorder %s150, %s151
      %p165 = scmp.eq.s32.totalorder %s28, 1
      %p166 = por %p164, %p165
      %p168 = scmp.ne.s32.totalorder %s151, %s167
      %p169 = scmp.eq.s32.totalorder %s28, 0
      %p170 = por %p168, %p169
      %p171 = scmp.le.s32.totalorder 1, %s22
      %p172 = scmp.lt.s32.totalorder %s22, 3
      %p173 = pnand %p171, %p172
      %p174 = pneg %p173
      // Predicated region
      $region9: #{tpu_custom_call.1} parent=5 // pred_check
        _
      $region10: #{tpu_custom_call.1} parent=5 // pred_check_branch
        %176 = sbr.rel (%p173) target = $region12
      $region11: #{tpu_custom_call.1} parent=5 // pred_region
        %s177 = ssub.s32 %s22, 1
        // Predicated region
        $region13: #{tpu_custom_call.1} parent=11 // pred_check
          %p178 = pneg %p69
        $region14: #{tpu_custom_call.1} parent=11 // pred_check_branch
          %180 = sbr.rel (%p178) target = $region16
        $region15: #{tpu_custom_call.1} parent=11 // pred_region
          _
        $region16: #{tpu_custom_call.1} parent=11 // pred_fallthru
          _
        // Predicated region
        $region17: #{tpu_custom_call.1} parent=11 // pred_check
          %p181 = pneg %p90
        $region18: #{tpu_custom_call.1} parent=11 // pred_check_branch
          %183 = sbr.rel (%p181) target = $region20
        $region19: #{tpu_custom_call.1} parent=11 // pred_region
          %185 = vsyncadd [#allocation6], 0
          %s186 = sshll.u32 %s2, 4
          %s187 = int_to_ptr.hbm [resolvable:$true] %s186
          %s188 = sshll.u32 [#allocation5], 4
          %s189 = int_to_ptr.vmem [resolvable:$true] %s188
          %194 = dma.hbm_to_vmem [thread:$0]  %s187, 256, %s189, [#allocation6], 128, 128, 8
        $region20: #{tpu_custom_call.1} parent=11 // pred_fallthru
          _
        // Predicated region
        $region21: #{tpu_custom_call.1} parent=11 // pred_check
          %p195 = pneg %p111
        $region22: #{tpu_custom_call.1} parent=11 // pred_check_branch
          %197 = sbr.rel (%p195) target = $region24
        $region23: #{tpu_custom_call.1} parent=11 // pred_region
          _
        $region24: #{tpu_custom_call.1} parent=11 // pred_fallthru
          _
      $region12: #{tpu_custom_call.1} parent=5 // pred_fallthru
        _
      %p198 = scmp.lt.s32.totalorder %s22, 2
      // Predicated region
      $region25: #{tpu_custom_call.1} parent=5 // pred_check
        %p199 = pneg %p198
      $region26: #{tpu_custom_call.1} parent=5 // pred_check_branch
        %201 = sbr.rel (%p199) target = $region28
      $region27: #{tpu_custom_call.1} parent=5 // pred_region
        // Predicated region
        $region29: #{tpu_custom_call.1} parent=27 // pred_check
          %p202 = pneg %p42
        $region30: #{tpu_custom_call.1} parent=27 // pred_check_branch
          %204 = sbr.rel (%p202) target = $region32
        $region31: #{tpu_custom_call.1} parent=27 // pred_region
          %s205 = sand.u32 %s32, 1
          %s206 = scalar_lea.sflag [#allocation3], %s205
          %s207 = sand.u32 %s32, 1
          %s208 = smul.addr %s207, 32
          %s209 = scalar_lea.vmem [#allocation2], %s208
          %211 = vsyncadd %s206, 0
          %s212 = smul.addr %s22, 4
          %s213 = smul.addr %s212, 8
          %s214 = scalar_lea.hbm %s0, %s213
          %s216 = sshll.u32 %s214, 4
          %s217 = int_to_ptr.hbm [resolvable:$true] %s216
          %s218 = sshll.u32 %s209, 4
          %s219 = int_to_ptr.vmem [resolvable:$true] %s218
          %221 = dma.hbm_to_vmem [thread:$0]  %s217, 512, %s219, %s206
        $region32: #{tpu_custom_call.1} parent=27 // pred_fallthru
          _
      $region28: #{tpu_custom_call.1} parent=5 // pred_fallthru
        _
      %p222 = scmp.le.s32.totalorder 1, %s22
      %p223 = scmp.lt.s32.totalorder %s22, 3
      %p224 = pnand %p222, %p223
      %p225 = pneg %p224
      // Predicated region
      $region33: #{tpu_custom_call.1} parent=5 // pred_check
        _
      $region34: #{tpu_custom_call.1} parent=5 // pred_check_branch
        %227 = sbr.rel (%p224) target = $region36
      $region35: #{tpu_custom_call.1} parent=5 // pred_region
        %s228 = ssub.s32 %s22, 1
        %s229 = sand.u32 %s35, 1
        %s230 = scalar_lea.sflag [#allocation3], %s229
        %s231 = sand.u32 %s35, 1
        %s232 = smul.addr %s231, 32
        %s233 = scalar_lea.vmem [#allocation2], %s232
        // Predicated region
        $region37: #{tpu_custom_call.1} parent=35 // pred_check
          %p234 = pneg %p48
        $region38: #{tpu_custom_call.1} parent=35 // pred_check_branch
          %236 = sbr.rel (%p234) target = $region40
        $region39: #{tpu_custom_call.1} parent=35 // pred_region
          %238 = dma.done %s230, 512
        $region40: #{tpu_custom_call.1} parent=35 // pred_fallthru
          _
        // Predicated region
        $region41: #{tpu_custom_call.1} parent=35 // pred_check
          %p239 = pneg %p90
        $region42: #{tpu_custom_call.1} parent=35 // pred_check_branch
          %241 = sbr.rel (%p239) target = $region44
        $region43: #{tpu_custom_call.1} parent=35 // pred_region
          %243 = dma.done [#allocation6], 256
        $region44: #{tpu_custom_call.1} parent=35 // pred_fallthru
          _
        %s244 = sand.u32 %s35, 1
        %s245 = scalar_lea.sflag [#allocation3], %s244
        %s246 = sand.u32 %s35, 1
        %s247 = smul.addr %s246, 32
        %s248 = scalar_lea.vmem [#allocation2], %s247
        %p249 = pneg %p48
        %p250 = pneg %p45
        %p251 = pneg %p69
        %p252 = pneg %p66
        %p253 = pneg %p90
        %p254 = pneg %p87
        %p255 = pneg %p111
        %p256 = pneg %p108
        %p257 = pneg %p137
        %p258 = pneg %p134
        %s259 = sand.u32 %s124, 1
        %s260 = scalar_lea.sflag [#allocation4], %s259
        %s261 = sand.u32 %s124, 1
        %s262 = smul.addr %s261, 24
        %s263 = scalar_lea.vmem [#allocation7], %s262
        %p264 = pneg %p163
        %p265 = pneg %p160
        %s266 = sand.u32 %s150, 1
        %s267 = scalar_lea.sflag [#allocation9], %s266
        %s268 = sand.u32 %s150, 1
        %s269 = smul.addr %s268, 3
        %s270 = scalar_lea.vmem [#allocation8], %s269
        %v271 = vld [vmem:[%s233] sm:$0xff]
        %v272 = vld [vmem:[%s233 + $0x8] sm:$0xff]
        %v273 = vld [vmem:[%s233 + $0x10] sm:$0xff]
        %v274 = vld [vmem:[%s233 + $0x18] sm:$0xff]
        %v275 = vlaneseq
        %v276 = vshrl.u32 %v275, 7
        %vm277 = vcmp.lt.s32.totalorder %v276, 4
        %v278 = vperm.slane %v271, 4
        %v279 = vperm.slane %v272, 4
        %v280 = vperm.slane %v273, 4
        %v281 = vperm.slane %v274, 4
        %v282 = vmul.f32 %v271, %v278
        %v283 = vmul.f32 %v272, %v279
        %v284 = vmul.f32 %v273, %v280
        %v285 = vmul.f32 %v274, %v281
        %v286 = vsel %vm277, 1, 0
        %vm287 = vcmp.eq.s32.totalorder %v286, 1
        %v288 = vsel %vm287, %v282, %v271
        %v289 = vsel %vm287, %v283, %v272
        %v290 = vsel %vm287, %v284, %v273
        %v291 = vsel %vm287, %v285, %v274
        %296 = vrot.lane.b32.xlu0 %v288, 127
        %v297 = vpop.permute.xlu0 %296
        %298 = vrot.lane.b32.xlu0 %v289, 127
        %v299 = vpop.permute.xlu0 %298
        %300 = vrot.lane.b32.xlu0 %v290, 127
        %v301 = vpop.permute.xlu0 %300
        %302 = vrot.lane.b32.xlu0 %v291, 127
        %v303 = vpop.permute.xlu0 %302
        %vm304 = vcmask 1039360
        %v305 = vsel %vm304, %v297, %v299
        %v306 = vsel %vm304, %v299, %v301
        %v307 = vsel %vm304, %v301, %v303
        %311 = vrot.lane.b32.xlu0 %v288, 126
        %v312 = vpop.permute.xlu0 %311
        %313 = vrot.lane.b32.xlu0 %v289, 126
        %v314 = vpop.permute.xlu0 %313
        %315 = vrot.lane.b32.xlu0 %v290, 126
        %v316 = vpop.permute.xlu0 %315
        %317 = vrot.lane.b32.xlu0 %v291, 126
        %v318 = vpop.permute.xlu0 %317
        %vm319 = vcmask 1031168
        %v320 = vsel %vm319, %v312, %v314
        %v321 = vsel %vm319, %v314, %v316
        %v322 = vsel %vm319, %v316, %v318
        %326 = vrot.lane.b32.xlu0 %v288, 110
        %v327 = vpop.permute.xlu0 %326
        %328 = vrot.lane.b32.xlu0 %v289, 110
        %v329 = vpop.permute.xlu0 %328
        %330 = vrot.lane.b32.xlu0 %v290, 110
        %v331 = vpop.permute.xlu0 %330
        %332 = vrot.lane.b32.xlu0 %v291, 110
        %v333 = vpop.permute.xlu0 %332
        %vm334 = vcmask 900096
        %v335 = vsel %vm334, %v327, %v329
        %v336 = vsel %vm334, %v329, %v331
        %v337 = vsel %vm334, %v331, %v333
        %341 = vrot.lane.b32.xlu0 %v288, 109
        %v342 = vpop.permute.xlu0 %341
        %343 = vrot.lane.b32.xlu0 %v289, 109
        %v344 = vpop.permute.xlu0 %343
        %345 = vrot.lane.b32.xlu0 %v290, 109
        %v346 = vpop.permute.xlu0 %345
        %347 = vrot.lane.b32.xlu0 %v291, 109
        %v348 = vpop.permute.xlu0 %347
        %vm349 = vcmask 891904
        %v350 = vsel %vm349, %v342, %v344
        %v351 = vsel %vm349, %v344, %v346
        %v352 = vsel %vm349, %v346, %v348
        %356 = vrot.lane.b32.xlu0 %v288, 108
        %v357 = vpop.permute.xlu0 %356
        %358 = vrot.lane.b32.xlu0 %v289, 108
        %v359 = vpop.permute.xlu0 %358
        %360 = vrot.lane.b32.xlu0 %v290, 108
        %v361 = vpop.permute.xlu0 %360
        %362 = vrot.lane.b32.xlu0 %v291, 108
        %v363 = vpop.permute.xlu0 %362
        %vm364 = vcmask 883712
        %v365 = vsel %vm364, %v357, %v359
        %v366 = vsel %vm364, %v359, %v361
        %v367 = vsel %vm364, %v361, %v363
        %371 = vrot.lane.b32.xlu0 %v288, 92
        %v372 = vpop.permute.xlu0 %371
        %373 = vrot.lane.b32.xlu0 %v289, 92
        %v374 = vpop.permute.xlu0 %373
        %375 = vrot.lane.b32.xlu0 %v290, 92
        %v376 = vpop.permute.xlu0 %375
        %377 = vrot.lane.b32.xlu0 %v291, 92
        %v378 = vpop.permute.xlu0 %377
        %vm379 = vcmask 752640
        %v380 = vsel %vm379, %v372, %v374
        %v381 = vsel %vm379, %v374, %v376
        %v382 = vsel %vm379, %v376, %v378
        %386 = vrot.lane.b32.xlu0 %v288, 91
        %v387 = vpop.permute.xlu0 %386
        %388 = vrot.lane.b32.xlu0 %v289, 91
        %v389 = vpop.permute.xlu0 %388
        %390 = vrot.lane.b32.xlu0 %v290, 91
        %v391 = vpop.permute.xlu0 %390
        %392 = vrot.lane.b32.xlu0 %v291, 91
        %v393 = vpop.permute.xlu0 %392
        %vm394 = vcmask 744448
        %v395 = vsel %vm394, %v387, %v389
        %v396 = vsel %vm394, %v389, %v391
        %v397 = vsel %vm394, %v391, %v393
        %401 = vrot.lane.b32.xlu0 %v288, 90
        %v402 = vpop.permute.xlu0 %401
        %403 = vrot.lane.b32.xlu0 %v289, 90
        %v404 = vpop.permute.xlu0 %403
        %405 = vrot.lane.b32.xlu0 %v290, 90
        %v406 = vpop.permute.xlu0 %405
        %407 = vrot.lane.b32.xlu0 %v291, 90
        %v408 = vpop.permute.xlu0 %407
        %vm409 = vcmask 736256
        %v410 = vsel %vm409, %v402, %v404
        %v411 = vsel %vm409, %v404, %v406
        %v412 = vsel %vm409, %v406, %v408
        %v416 = vld [vmem:[#allocation5] sm:$0xff]
        %v417 = vld [vmem:[#allocation5 + $0x8] sm:$0x1]
        %vm418 = vcmask 588800
        %v420 = vsel %vm418, %v416, 0
        %v423 = vsel %vm418, %v417, 0
        %425 = vmatpush.msra.mxu0 0.0
        %426 = vmatpush.msra.mxu0 0.0
        %427 = vmatpush.msra.mxu0 0.0
        %428 = vmatpush.msra.mxu0 0.0
        %429 = vmatpush.msra.mxu0 0.0
        %430 = vmatpush.msra.mxu0 0.0
        %431 = vmatpush.msra.mxu0 0.0
        %432 = vmatpush.msra.mxu0 %v410
        %433 = vmatpush.msra.mxu0 %v395
        %434 = vmatpush.msra.mxu0 %v380
        %435 = vmatpush.msra.mxu0 %v365
        %436 = vmatpush.msra.mxu0 %v350
        %437 = vmatpush.msra.mxu0 %v335
        %438 = vmatpush.msra.mxu0 %v320
        %439 = vmatpush.msra.mxu0 %v305
        %440 = vmatpush.msra.mxu0 %v288
        %441 = vmatmul.f32.gmra.mxu0 %v420
        %v442 = vpop.f32.mrf.mxu0
        %v443 = vadd.f32 0.0, %v442
        %444 = vmatmul.f32.gmra.mxu0 %v423
        %v445 = vpop.f32.mrf.mxu0
        %v446 = vadd.f32 0.0, %v445
        %447 = vdwg.mxu0
        %448 = vmatpush.msra.mxu0 0.0
        %449 = vmatpush.msra.mxu0 0.0
        %450 = vmatpush.msra.mxu0 0.0
        %451 = vmatpush.msra.mxu0 0.0
        %452 = vmatpush.msra.mxu0 0.0
        %453 = vmatpush.msra.mxu0 0.0
        %454 = vmatpush.msra.mxu0 0.0
        %455 = vmatpush.msra.mxu0 %v411
        %456 = vmatpush.msra.mxu0 %v396
        %457 = vmatpush.msra.mxu0 %v381
        %458 = vmatpush.msra.mxu0 %v366
        %459 = vmatpush.msra.mxu0 %v351
        %460 = vmatpush.msra.mxu0 %v336
        %461 = vmatpush.msra.mxu0 %v321
        %462 = vmatpush.msra.mxu0 %v306
        %463 = vmatpush.msra.mxu0 %v289
        %464 = vmatmul.f32.gmra.mxu0 %v420
        %v465 = vpop.f32.mrf.mxu0
        %v466 = vadd.f32 0.0, %v465
        %467 = vmatmul.f32.gmra.mxu0 %v423
        %v468 = vpop.f32.mrf.mxu0
        %v469 = vadd.f32 0.0, %v468
        %470 = vdwg.mxu0
        %471 = vmatpush.msra.mxu0 0.0
        %472 = vmatpush.msra.mxu0 0.0
        %473 = vmatpush.msra.mxu0 0.0
        %474 = vmatpush.msra.mxu0 0.0
        %475 = vmatpush.msra.mxu0 0.0
        %476 = vmatpush.msra.mxu0 0.0
        %477 = vmatpush.msra.mxu0 0.0
        %478 = vmatpush.msra.mxu0 %v412
        %479 = vmatpush.msra.mxu0 %v397
        %480 = vmatpush.msra.mxu0 %v382
        %481 = vmatpush.msra.mxu0 %v367
        %482 = vmatpush.msra.mxu0 %v352
        %483 = vmatpush.msra.mxu0 %v337
        %484 = vmatpush.msra.mxu0 %v322
        %485 = vmatpush.msra.mxu0 %v307
        %486 = vmatpush.msra.mxu0 %v290
        %487 = vmatmul.f32.gmra.mxu0 %v420
        %v488 = vpop.f32.mrf.mxu0
        %v489 = vadd.f32 0.0, %v488
        %490 = vmatmul.f32.gmra.mxu0 %v423
        %v491 = vpop.f32.mrf.mxu0
        %v492 = vadd.f32 0.0, %v491
        %493 = vdwg.mxu0
        %v494 = vadd.f32 %v446, 1e-08
        %v495 = vadd.f32 %v469, 1e-08
        %v496 = vadd.f32 %v492, 1e-08
        %v497 = vrcp.pop %v494
        %v498 = vmul.f32 %v494, %v497
        %v499 = vsub.f32 1.0, %v498
        %v500 = vmul.f32 %v497, %v499
        %v501 = vadd.f32 %v497, %v500
        %vm502 = vweird.f32 %v494
        %vm503 = vweird.f32 %v497
        %vm504 = vmor %vm502, %vm503
        %v505 = vsel %vm504, %v497, %v501
        %v506 = vand.u32 2147483647, %v494
        %vm507 = vcmp.eq.f32.partialorder %v506, 8.507059e+37
        %v508 = vand.u32 %v494, 2147483648
        %v509 = vor.u32 1.1754944e-38, %v508
        %v510 = vsel %vm507, %v509, %v505
        %v511 = vmul.f32 1.0, %v510
        %v512 = vrcp.pop %v495
        %v513 = vmul.f32 %v495, %v512
        %v514 = vsub.f32 1.0, %v513
        %v515 = vmul.f32 %v512, %v514
        %v516 = vadd.f32 %v512, %v515
        %vm517 = vweird.f32 %v495
        %vm518 = vweird.f32 %v512
        %vm519 = vmor %vm517, %vm518
        %v520 = vsel %vm519, %v512, %v516
        %v521 = vand.u32 2147483647, %v495
        %vm522 = vcmp.eq.f32.partialorder %v521, 8.507059e+37
        %v523 = vand.u32 %v495, 2147483648
        %v524 = vor.u32 1.1754944e-38, %v523
        %v525 = vsel %vm522, %v524, %v520
        %v526 = vmul.f32 1.0, %v525
        %v527 = vrcp.pop %v496
        %v528 = vmul.f32 %v496, %v527
        %v529 = vsub.f32 1.0, %v528
        %v530 = vmul.f32 %v527, %v529
        %v531 = vadd.f32 %v527, %v530
        %vm532 = vweird.f32 %v496
        %vm533 = vweird.f32 %v527
        %vm534 = vmor %vm532, %vm533
        %v535 = vsel %vm534, %v527, %v531
        %v536 = vand.u32 2147483647, %v496
        %vm537 = vcmp.eq.f32.partialorder %v536, 8.507059e+37
        %v538 = vand.u32 %v496, 2147483648
        %v539 = vor.u32 1.1754944e-38, %v538
        %v540 = vsel %vm537, %v539, %v535
        %v541 = vmul.f32 1.0, %v540
        %v542 = vperm.slane %v511, 0
        %v543 = vperm.slane %v526, 0
        %v544 = vperm.slane %v541, 0
        %v545 = vmul.f32 %v443, %v542
        %v546 = vmul.f32 %v466, %v543
        %v547 = vmul.f32 %v489, %v544
        %v548 = vld [vmem:[%s3] sm:$0xff]
        %550 = vset.pattern.permute.xlu0 0
        %551 = vperm.xlu0 %550, %v548
        %v552 = vpop.permute.xlu0 %551
        %v554 = vadd.f32 %v545, %v552
        %v555 = vadd.f32 %v546, %v552
        %v556 = vadd.f32 %v547, %v552
        %v557 = vmax.f32 %v554, 0.0
        %v558 = vmax.f32 %v555, 0.0
        %v559 = vmax.f32 %v556, 0.0
        %560 = vst [vmem:[%s263] sm:$0xff] %v557
        %561 = vst [vmem:[%s263 + $0x8] sm:$0xff] %v558
        %562 = vst [vmem:[%s263 + $0x10] sm:$0xff] %v559
        %v563 = vld [vmem:[%s1] sm:$0xf]
        %v565 = vperm.slane %v563, 0
        %v566 = vperm.slane %v563, 1
        %v567 = vperm.slane %v563, 2
        %v568 = vperm.slane %v563, 3
        %v573 = vadd.f32 %v271, %v565
        %v574 = vadd.f32 %v272, %v566
        %v575 = vadd.f32 %v273, %v567
        %v576 = vadd.f32 %v274, %v568
        %581 = vrot.lane.b32.xlu0 %v573, 127
        %v582 = vpop.permute.xlu0 %581
        %583 = vrot.lane.b32.xlu0 %v574, 127
        %v584 = vpop.permute.xlu0 %583
        %585 = vrot.lane.b32.xlu0 %v575, 127
        %v586 = vpop.permute.xlu0 %585
        %587 = vrot.lane.b32.xlu0 %v576, 127
        %v588 = vpop.permute.xlu0 %587
        %v589 = vsel %vm304, %v582, %v584
        %v590 = vsel %vm304, %v584, %v586
        %v591 = vsel %vm304, %v586, %v588
        %v595 = vmax.f32 %v573, %v589
        %v596 = vmax.f32 %v574, %v590
        %v597 = vmax.f32 %v575, %v591
        %598 = vrot.lane.b32.xlu0 %v573, 126
        %v599 = vpop.permute.xlu0 %598
        %600 = vrot.lane.b32.xlu0 %v574, 126
        %v601 = vpop.permute.xlu0 %600
        %602 = vrot.lane.b32.xlu0 %v575, 126
        %v603 = vpop.permute.xlu0 %602
        %604 = vrot.lane.b32.xlu0 %v576, 126
        %v605 = vpop.permute.xlu0 %604
        %v606 = vsel %vm319, %v599, %v601
        %v607 = vsel %vm319, %v601, %v603
        %v608 = vsel %vm319, %v603, %v605
        %v612 = vmax.f32 %v595, %v606
        %v613 = vmax.f32 %v596, %v607
        %v614 = vmax.f32 %v597, %v608
        %615 = vrot.lane.b32.xlu0 %v573, 110
        %v616 = vpop.permute.xlu0 %615
        %617 = vrot.lane.b32.xlu0 %v574, 110
        %v618 = vpop.permute.xlu0 %617
        %619 = vrot.lane.b32.xlu0 %v575, 110
        %v620 = vpop.permute.xlu0 %619
        %621 = vrot.lane.b32.xlu0 %v576, 110
        %v622 = vpop.permute.xlu0 %621
        %v623 = vsel %vm334, %v616, %v618
        %v624 = vsel %vm334, %v618, %v620
        %v625 = vsel %vm334, %v620, %v622
        %v629 = vmax.f32 %v612, %v623
        %v630 = vmax.f32 %v613, %v624
        %v631 = vmax.f32 %v614, %v625
        %632 = vrot.lane.b32.xlu0 %v573, 109
        %v633 = vpop.permute.xlu0 %632
        %634 = vrot.lane.b32.xlu0 %v574, 109
        %v635 = vpop.permute.xlu0 %634
        %636 = vrot.lane.b32.xlu0 %v575, 109
        %v637 = vpop.permute.xlu0 %636
        %638 = vrot.lane.b32.xlu0 %v576, 109
        %v639 = vpop.permute.xlu0 %638
        %v640 = vsel %vm349, %v633, %v635
        %v641 = vsel %vm349, %v635, %v637
        %v642 = vsel %vm349, %v637, %v639
        %v646 = vmax.f32 %v629, %v640
        %v647 = vmax.f32 %v630, %v641
        %v648 = vmax.f32 %v631, %v642
        %649 = vrot.lane.b32.xlu0 %v573, 108
        %v650 = vpop.permute.xlu0 %649
        %651 = vrot.lane.b32.xlu0 %v574, 108
        %v652 = vpop.permute.xlu0 %651
        %653 = vrot.lane.b32.xlu0 %v575, 108
        %v654 = vpop.permute.xlu0 %653
        %655 = vrot.lane.b32.xlu0 %v576, 108
        %v656 = vpop.permute.xlu0 %655
        %v657 = vsel %vm364, %v650, %v652
        %v658 = vsel %vm364, %v652, %v654
        %v659 = vsel %vm364, %v654, %v656
        %v663 = vmax.f32 %v646, %v657
        %v664 = vmax.f32 %v647, %v658
        %v665 = vmax.f32 %v648, %v659
        %666 = vrot.lane.b32.xlu0 %v573, 92
        %v667 = vpop.permute.xlu0 %666
        %668 = vrot.lane.b32.xlu0 %v574, 92
        %v669 = vpop.permute.xlu0 %668
        %670 = vrot.lane.b32.xlu0 %v575, 92
        %v671 = vpop.permute.xlu0 %670
        %672 = vrot.lane.b32.xlu0 %v576, 92
        %v673 = vpop.permute.xlu0 %672
        %v674 = vsel %vm379, %v667, %v669
        %v675 = vsel %vm379, %v669, %v671
        %v676 = vsel %vm379, %v671, %v673
        %v680 = vmax.f32 %v663, %v674
        %v681 = vmax.f32 %v664, %v675
        %v682 = vmax.f32 %v665, %v676
        %683 = vrot.lane.b32.xlu0 %v573, 91
        %v684 = vpop.permute.xlu0 %683
        %685 = vrot.lane.b32.xlu0 %v574, 91
        %v686 = vpop.permute.xlu0 %685
        %687 = vrot.lane.b32.xlu0 %v575, 91
        %v688 = vpop.permute.xlu0 %687
        %689 = vrot.lane.b32.xlu0 %v576, 91
        %v690 = vpop.permute.xlu0 %689
        %v691 = vsel %vm394, %v684, %v686
        %v692 = vsel %vm394, %v686, %v688
        %v693 = vsel %vm394, %v688, %v690
        %v697 = vmax.f32 %v680, %v691
        %v698 = vmax.f32 %v681, %v692
        %v699 = vmax.f32 %v682, %v693
        %700 = vrot.lane.b32.xlu0 %v573, 90
        %v701 = vpop.permute.xlu0 %700
        %702 = vrot.lane.b32.xlu0 %v574, 90
        %v703 = vpop.permute.xlu0 %702
        %704 = vrot.lane.b32.xlu0 %v575, 90
        %v705 = vpop.permute.xlu0 %704
        %706 = vrot.lane.b32.xlu0 %v576, 90
        %v707 = vpop.permute.xlu0 %706
        %v708 = vsel %vm409, %v701, %v703
        %v709 = vsel %vm409, %v703, %v705
        %v710 = vsel %vm409, %v705, %v707
        %v714 = vmax.f32 %v697, %v708
        %v715 = vmax.f32 %v698, %v709
        %v716 = vmax.f32 %v699, %v710
        %720 = vst [vmem:[#allocation1] sm:$0xff] %v714
        %721 = vst [vmem:[#allocation1 + $0x9] sm:$0xff] %v715
        %722 = vst [vmem:[#allocation1 + $0x12] sm:$0xff] %v716
        %s723 = scalar_lea.vmem [#allocation1], 4
        %v724 = vld [vmem:[%s723] ss:$9 sm:$0xff]
        %v726 = vlaneseq
        %vm727 = vcmp.ge.s32.totalorder %v726, 0
        %vm728 = vcmp.lt.s32.totalorder %v726, 384
        %vm729 = vmand %vm727, %vm728
        %730 = vst.msk [vmem:[%s270] sm:$0x7] %vm729, %v724
        %s731 = sand.u32 %s124, 1
        %s732 = scalar_lea.sflag [#allocation4], %s731
        %s733 = sand.u32 %s124, 1
        %s734 = smul.addr %s733, 24
        %s735 = scalar_lea.vmem [#allocation7], %s734
        %s736 = sand.u32 %s150, 1
        %s737 = scalar_lea.sflag [#allocation9], %s736
        %s738 = sand.u32 %s150, 1
        %s739 = smul.addr %s738, 3
        %s740 = scalar_lea.vmem [#allocation8], %s739
        // Predicated region
        $region45: #{tpu_custom_call.1} parent=35 // pred_check
          %p741 = pneg %p134
        $region46: #{tpu_custom_call.1} parent=35 // pred_check_branch
          %743 = sbr.rel (%p741) target = $region48
        $region47: #{tpu_custom_call.1} parent=35 // pred_region
          %745 = vsyncadd %s732, 0
          %s746 = smul.addr %s27, 3
          %s747 = smul.addr %s746, 8
          %s748 = scalar_lea.hbm %s4, %s747
          %s750 = sshll.u32 %s735, 4
          %s751 = int_to_ptr.vmem [resolvable:$true] %s750
          %s752 = sshll.u32 %s748, 4
          %s753 = int_to_ptr.hbm [resolvable:$true] %s752
          %755 = dma.vmem_to_hbm [thread:$0]  %s751, 384, %s753, %s732
        $region48: #{tpu_custom_call.1} parent=35 // pred_fallthru
          _
        // Predicated region
        $region49: #{tpu_custom_call.1} parent=35 // pred_check
          %p756 = pneg %p160
        $region50: #{tpu_custom_call.1} parent=35 // pred_check_branch
          %758 = sbr.rel (%p756) target = $region52
        $region51: #{tpu_custom_call.1} parent=35 // pred_region
          %760 = vsyncadd %s737, 0
          %s761 = smul.addr %s27, 3
          %s762 = scalar_lea.hbm %s5, %s761
          %s764 = sshll.u32 %s740, 4
          %s765 = int_to_ptr.vmem [resolvable:$true] %s764
          %s766 = sshll.u32 %s762, 4
          %s767 = int_to_ptr.hbm [resolvable:$true] %s766
          %769 = dma.vmem_to_hbm [thread:$0]  %s765, 48, %s767, %s737
        $region52: #{tpu_custom_call.1} parent=35 // pred_fallthru
          _
      $region36: #{tpu_custom_call.1} parent=5 // pred_fallthru
        _
      %p770 = scmp.le.s32.totalorder 2, %s22
      // Predicated region
      $region53: #{tpu_custom_call.1} parent=5 // pred_check
        %p771 = pneg %p770
      $region54: #{tpu_custom_call.1} parent=5 // pred_check_branch
        %773 = sbr.rel (%p771) target = $region56
      $region55: #{tpu_custom_call.1} parent=5 // pred_region
        %s774 = ssub.s32 %s22, 2
        // Predicated region
        $region57: #{tpu_custom_call.1} parent=55 // pred_check
          %p775 = pneg %p140
        $region58: #{tpu_custom_call.1} parent=55 // pred_check_branch
          %777 = sbr.rel (%p775) target = $region60
        $region59: #{tpu_custom_call.1} parent=55 // pred_region
          %s778 = sand.u32 %s125, 1
          %s779 = scalar_lea.sflag [#allocation4], %s778
          %s780 = sand.u32 %s125, 1
          %s781 = smul.addr %s780, 24
          %s782 = scalar_lea.vmem [#allocation7], %s781
          %784 = dma.done %s779, 384
        $region60: #{tpu_custom_call.1} parent=55 // pred_fallthru
          _
        // Predicated region
        $region61: #{tpu_custom_call.1} parent=55 // pred_check
          %p785 = pneg %p166
        $region62: #{tpu_custom_call.1} parent=55 // pred_check_branch
          %787 = sbr.rel (%p785) target = $region64
        $region63: #{tpu_custom_call.1} parent=55 // pred_region
          %s788 = sand.u32 %s151, 1
          %s789 = scalar_lea.sflag [#allocation9], %s788
          %s790 = sand.u32 %s151, 1
          %s791 = smul.addr %s790, 3
          %s792 = scalar_lea.vmem [#allocation8], %s791
          %794 = dma.done %s789, 48
        $region64: #{tpu_custom_call.1} parent=55 // pred_fallthru
          _
      $region56: #{tpu_custom_call.1} parent=5 // pred_fallthru
        _
    $region6: #{tpu_custom_call.1} parent=1 // loop_footer
      %s26 = sadd.s32 1, %s22
    $region7: #{tpu_custom_call.1} parent=1 // loop_footer_branch
      %21 = sbr.rel target = $region3
    $region8: #{tpu_custom_call.1} parent=1 // loop_exit
      _
    %795 = vsyncpa [#allocation3], 1
    %s796 = scalar_lea.sflag [#allocation3], 1
    %797 = vsyncpa %s796, 1
    %798 = vsyncpa [#allocation6], 1
    %799 = vsyncpa [#allocation4], 1
    %s800 = scalar_lea.sflag [#allocation4], 1
    %801 = vsyncpa %s800, 1
    %802 = vsyncpa [#allocation9], 1
    %s803 = scalar_lea.sflag [#allocation9], 1
    %804 = vsyncpa %s803, 1

</llo_original>
